<compile_context>
chip_gen: v6e
topology: v6e:2x2x1
jax: 0.10.0
libtpu: 0.0.40
codegen_flags: <defaults>
</compile_context>

<pallas_src>
import functools

import jax
import jax.numpy as jnp
from jax import lax
from jax.experimental import pallas as pl
from jax.experimental.pallas import tpu as pltpu


def _self_attn_kernel(x_ref, w1_ref, b1_ref, w2row_ref, out_ref, *, t_valid):
    # x_ref:     (block_b, T_pad, H)  batch tile (f32 or bf16)
    # w1_ref:    (H, 64)              first Linear weight (same dtype as x)
    # b1_ref:    (1, 64)  f32         first Linear bias
    # w2row_ref: (1, 64)  f32         second Linear weight as a row (w2[:, 0])
    # out_ref:   (block_b, H)         f32 output slab
    bt, t_pad, h = x_ref.shape
    x = x_ref[...]                                             # (bt, T, H)

    # --- projection: one (bt*T, H) @ (H, 64) MXU matmul + bias + ReLU (f32 acc) ---
    xf = x.reshape(bt * t_pad, h)                              # sublane relabel (T % 8 == 0)
    hid = jnp.dot(xf, w1_ref[...], preferred_element_type=jnp.float32)
    hid = jnp.maximum(hid + b1_ref[...], 0.0)                  # (bt*T, 64) f32

    # --- Linear(64, 1): VPU multiply + lane reduce (avoids an N=1 MXU matmul) ---
    hid3 = hid.reshape(bt, t_pad, 64)                          # (bt, T, 64)
    e = jnp.sum(hid3 * w2row_ref[...], axis=-1, keepdims=True)  # (bt, T, 1)
    # b2 bias intentionally omitted: softmax(e + c) == softmax(e).

    if t_pad != t_valid:  # static branch: mask zero-padded time steps
        tmask = lax.broadcasted_iota(jnp.int32, (1, t_pad, 1), 1) < t_valid
        e = jnp.where(tmask, e, -jnp.inf)

    # --- numerically stable softmax over time (exact normalization) ---
    e_max = jnp.max(e, axis=1, keepdims=True)                  # (bt, 1, 1)
    p = jnp.exp(e - e_max)                                     # (bt, T, 1)
    w = p / jnp.sum(p, axis=1, keepdims=True)                  # (bt, T, 1) f32

    # --- weighted sum over time: sublane reduce, H stays on lanes ---
    out = jnp.sum(x.astype(jnp.float32) * w, axis=1)           # (bt, H) f32
    out_ref[...] = out.astype(out_ref.dtype)


def _vmem_limit_bytes():
    """Generation-aware VMEM limit (v5e/v6e: 128 MiB phys, v7x: 64 MiB phys)."""
    try:
        cap = int(pltpu.get_tpu_info().vmem_capacity_bytes)
    except Exception:
        cap = 64 << 20  # most conservative (v7x per-core physical)
    if cap <= 0:
        cap = 64 << 20
    return int(min(cap * 3 // 4, 96 << 20))


def _choose_block_b(B, T, H, in_itemsize, budget):
    """Largest legal batch tile whose per-grid-step working set fits `budget`.

    Counts the double-buffered x/out blocks AND the in-kernel f32 intermediates
    (hid is (block_b*T, 64) f32 -- larger than the x tile when H <= 64 -- plus
    the f32 upcast of the x tile and the e/p/w temporaries).  Caps block_b so
    the grid has >= 2 steps (v7x 2-TC sharding, DMA/compute pipelining).
    """
    per_b = (
        2 * T * H * in_itemsize   # x tile, double-buffered
        + 2 * H * 4               # f32 out tile, double-buffered
        + T * H * 4               # f32 upcast of the x tile (weighted sum)
        + T * 64 * 4              # hid (f32)
        + 4 * T * 4               # e / p / w / mask temporaries (f32)
    )
    fixed = 2 * (H * 64 * in_itemsize + 2 * 64 * 4)  # W1 / b1 / w2row blocks
    max_bb = max((budget - fixed) // per_b, 1)
    if B > 8:
        max_bb = min(max_bb, B // 2)   # guarantee >= 2 grid steps
    # Legal tiles: divisors of B that are multiples of 8 (block_b is the
    # sublane axis of the (block_b, H) output block) or the full batch.
    legal = [d for d in range(1, B + 1) if B % d == 0 and (d % 8 == 0 or d == B)]
    fitting = [d for d in legal if d <= max_bb]
    return max(fitting) if fitting else min(legal)


def self_attention(x, w1, b1, w2, b2=None, *, block_b=None, compute_dtype=None):
    """x: (B, T, H); returns (B, H) in x's original dtype.

    b2 is accepted for interface parity with nn.Linear(64, 1) but unused:
    softmax over the energies is invariant to a constant shift.
    `compute_dtype=jnp.bfloat16` casts x/W1 before the kernel (halves HBM
    traffic of the dominant stream; softmax / accumulation stay f32).
    """
    B, T, H = x.shape
    out_dtype = x.dtype

    if compute_dtype is not None:
        x = x.astype(compute_dtype)
        w1 = w1.astype(compute_dtype)
    else:
        w1 = w1.astype(x.dtype)
    in_itemsize = x.dtype.itemsize

    # Pad T to a multiple of 8 so the in-kernel reshape is a pure sublane relabel.
    t_pad = ((T + 7) // 8) * 8
    if t_pad != T:
        x = jnp.pad(x, ((0, 0), (0, t_pad - T), (0, 0)))

    vmem_limit = _vmem_limit_bytes()
    if block_b is None:
        block_b = _choose_block_b(B, t_pad, H, in_itemsize, budget=vmem_limit // 2)
    assert B % block_b == 0

    b1_2d = b1.reshape(1, 64).astype(jnp.float32)
    w2_row = w2.reshape(1, 64).astype(jnp.float32)   # (64, 1) -> row vector

    grid_spec = pltpu.PrefetchScalarGridSpec(
        num_scalar_prefetch=0,
        grid=(B // block_b,),
        in_specs=[
            pl.BlockSpec((block_b, t_pad, H), lambda b: (b, 0, 0)),  # batch tile
            pl.BlockSpec((H, 64), lambda b: (0, 0)),                 # W1 (full)
            pl.BlockSpec((1, 64), lambda b: (0, 0)),                 # b1
            pl.BlockSpec((1, 64), lambda b: (0, 0)),                 # W2 row
        ],
        out_specs=pl.BlockSpec((block_b, H), lambda b: (b, 0)),      # dense slab
    )

    cost = pl.CostEstimate(
        flops=2 * B * t_pad * H * 64 + 2 * B * t_pad * 64 + 2 * B * t_pad * H,
        transcendentals=B * t_pad,
        bytes_accessed=int(
            x.size * in_itemsize + w1.size * in_itemsize + (B * H + 128) * 4
        ),
    )

    kernel = functools.partial(_self_attn_kernel, t_valid=T)

    return pl.pallas_call(
        kernel,
        out_shape=jax.ShapeDtypeStruct((B, H), out_dtype),
        grid_spec=grid_spec,
        compiler_params=pltpu.CompilerParams(
            dimension_semantics=("parallel",),
            vmem_limit_bytes=vmem_limit,
        ),
        cost_estimate=cost,
    )(x, w1, b1_2d, w2_row)


def self_attention_ref(x, w1, b1, w2, b2):
    """Pure-JAX reference matching the PyTorch forward (including b2)."""
    h = jnp.maximum(
        jnp.einsum("bth,hk->btk", x, w1, precision=lax.Precision.HIGHEST) + b1, 0.0
    )
    e = jnp.einsum("btk,ko->bto", h, w2, precision=lax.Precision.HIGHEST) + b2
    w = jax.nn.softmax(e[..., 0], axis=1)                     # (B, T)
    return jnp.sum(x * w[..., None], axis=1)                  # (B, H)


if __name__ == "__main__":
    B, T, H = 16, 8, 32

    key = jax.random.PRNGKey(0)
    kx, kw1, kb1, kw2, kb2 = jax.random.split(key, 5)

    x = jax.random.normal(kx, (B, T, H), dtype=jnp.float32)
    # Deterministic parameter init (shapes from nn.Linear(H,64), nn.Linear(64,1))
    w1 = jax.random.normal(kw1, (H, 64), dtype=jnp.float32) * 0.1
    b1 = jax.random.normal(kb1, (64,), dtype=jnp.float32) * 0.1
    w2 = jax.random.normal(kw2, (64, 1), dtype=jnp.float32) * 0.1
    b2 = jax.random.normal(kb2, (1,), dtype=jnp.float32) * 0.1

    ref = self_attention_ref(x, w1, b1, w2, b2)

    # f32 path. Tolerance covers the TPU matmul-precision gap between the
    # in-kernel MXU projection and the XLA reference; any semantic error
    # (wrong axis / weight ordering) would be orders of magnitude larger.
    out = jax.block_until_ready(self_attention(x, w1, b1, w2, b2))
    assert out.shape == (B, H)
    assert jnp.allclose(out, ref, atol=2e-2, rtol=2e-2), "f32 kernel mismatch"

    # bf16-input path (HBM-bound production config): looser tolerance for the
    # bf16 rounding of x / W1.
    out_bf16 = jax.block_until_ready(
        self_attention(x, w1, b1, w2, b2, compute_dtype=jnp.bfloat16)
    )
    assert out_bf16.shape == (B, H)
    assert jnp.allclose(out_bf16, ref, atol=5e-2, rtol=5e-2), "bf16 kernel mismatch"

    print("KERNEL_OK")
</pallas_src>

<mosaic_0001>
module attributes {stable_mosaic.version = 11 : i64} {
  func.func @_self_attn_kernel(%arg0: i32, %arg1: memref<8x8x32xf32, #tpu.memory_space<vmem>>, %arg2: memref<32x64xf32, #tpu.memory_space<vmem>>, %arg3: memref<1x64xf32, #tpu.memory_space<vmem>>, %arg4: memref<1x64xf32, #tpu.memory_space<vmem>>, %arg5: memref<8x32xf32, #tpu.memory_space<vmem>>) attributes {dimension_semantics = [#tpu.dimension_semantics<parallel>], iteration_bounds = array<i64: 2>, scalar_prefetch = 0 : i64, scratch_operands = 0 : i64, tpu.core_type = #tpu.core_type<tc>, window_params = [{transform_indices = @transform_0, window_bounds = array<i64: 8, 8, 32>}, {pipeline_mode = #tpu.pipeline_mode<synchronous>, transform_indices = @transform_1, window_bounds = array<i64: 32, 64>}, {pipeline_mode = #tpu.pipeline_mode<synchronous>, transform_indices = @transform_2, window_bounds = array<i64: 1, 64>}, {pipeline_mode = #tpu.pipeline_mode<synchronous>, transform_indices = @transform_3, window_bounds = array<i64: 1, 64>}, {transform_indices = @transform_4, window_bounds = array<i64: 8, 32>}]} {
    %c0 = arith.constant 0 : index
    %c0_0 = arith.constant 0 : index
    %c0_1 = arith.constant 0 : index
    %0 = vector.load %arg1[%c0, %c0_0, %c0_1] : memref<8x8x32xf32, #tpu.memory_space<vmem>>, vector<8x8x32xf32>
    %1 = vector.shape_cast %0 : vector<8x8x32xf32> to vector<64x32xf32>
    %c0_2 = arith.constant 0 : index
    %c0_3 = arith.constant 0 : index
    %2 = vector.load %arg2[%c0_2, %c0_3] : memref<32x64xf32, #tpu.memory_space<vmem>>, vector<32x64xf32>
    %cst = arith.constant dense<0.000000e+00> : vector<64x64xf32>
    %3 = tpu.matmul %1, %2, %cst {dimension_numbers = #tpu.dot_dimension_numbers<[1], [0], [0], [1], [0, 0, 1, 1], [], []>} : vector<64x32xf32>, vector<32x64xf32>, vector<64x64xf32> -> vector<64x64xf32>
    %c0_4 = arith.constant 0 : index
    %c0_5 = arith.constant 0 : index
    %4 = vector.load %arg3[%c0_4, %c0_5] : memref<1x64xf32, #tpu.memory_space<vmem>>, vector<1x64xf32>
    %5 = vector.broadcast %4 : vector<1x64xf32> to vector<64x64xf32>
    %6 = arith.addf %3, %5 : vector<64x64xf32>
    %cst_6 = arith.constant 0.000000e+00 : f32
    %7 = vector.broadcast %cst_6 : f32 to vector<64x64xf32>
    %8 = arith.maximumf %6, %7 : vector<64x64xf32>
    %9 = vector.shape_cast %8 : vector<64x64xf32> to vector<8x8x64xf32>
    %c0_7 = arith.constant 0 : index
    %c0_8 = arith.constant 0 : index
    %10 = vector.load %arg4[%c0_7, %c0_8] : memref<1x64xf32, #tpu.memory_space<vmem>>, vector<1x64xf32>
    %11 = vector.shape_cast %10 : vector<1x64xf32> to vector<1x1x64xf32>
    %12 = vector.broadcast %11 : vector<1x1x64xf32> to vector<8x8x64xf32>
    %13 = arith.mulf %9, %12 : vector<8x8x64xf32>
    %cst_9 = arith.constant dense<0.000000e+00> : vector<8x8xf32>
    %14 = vector.multi_reduction <add>, %13, %cst_9 [2] : vector<8x8x64xf32> to vector<8x8xf32>
    %15 = vector.shape_cast %14 : vector<8x8xf32> to vector<8x8x1xf32>
    %cst_10 = arith.constant dense<0xFF800000> : vector<8x1xf32>
    %16 = vector.multi_reduction <maximumf>, %15, %cst_10 [1] : vector<8x8x1xf32> to vector<8x1xf32>
    %17 = vector.shape_cast %16 : vector<8x1xf32> to vector<8x1x1xf32>
    %18 = vector.broadcast %17 : vector<8x1x1xf32> to vector<8x8x1xf32>
    %19 = arith.subf %15, %18 : vector<8x8x1xf32>
    %20 = math.exp %19 : vector<8x8x1xf32>
    %cst_11 = arith.constant dense<0.000000e+00> : vector<8x1xf32>
    %21 = vector.multi_reduction <add>, %20, %cst_11 [1] : vector<8x8x1xf32> to vector<8x1xf32>
    %22 = vector.shape_cast %21 : vector<8x1xf32> to vector<8x1x1xf32>
    %23 = vector.broadcast %22 : vector<8x1x1xf32> to vector<8x8x1xf32>
    %24 = arith.divf %20, %23 : vector<8x8x1xf32>
    %25 = vector.broadcast %24 : vector<8x8x1xf32> to vector<8x8x32xf32>
    %26 = arith.mulf %0, %25 : vector<8x8x32xf32>
    %cst_12 = arith.constant dense<0.000000e+00> : vector<8x32xf32>
    %27 = vector.multi_reduction <add>, %26, %cst_12 [1] : vector<8x8x32xf32> to vector<8x32xf32>
    %c0_13 = arith.constant 0 : index
    %c0_14 = arith.constant 0 : index
    %28 = vector.load %arg5[%c0_13, %c0_14] : memref<8x32xf32, #tpu.memory_space<vmem>>, vector<8x32xf32>
    tpu.vector_store %arg5[%c0_13, %c0_14], %27 {strides = array<i32>} : memref<8x32xf32, #tpu.memory_space<vmem>>, vector<8x32xf32>,
    return
  }
  func.func @transform_0(%arg0: i32) -> (i32, i32, i32) {
    %c0_i32 = arith.constant 0 : i32
    %c0_i32_0 = arith.constant 0 : i32
    %c0_i32_1 = arith.constant 0 : i32
    return %arg0, %c0_i32, %c0_i32_0 : i32, i32, i32
  }
  func.func @transform_1(%arg0: i32) -> (i32, i32) {
    %c0_i32 = arith.constant 0 : i32
    %c0_i32_0 = arith.constant 0 : i32
    %c0_i32_1 = arith.constant 0 : i32
    return %c0_i32, %c0_i32_0 : i32, i32
  }
  func.func @transform_2(%arg0: i32) -> (i32, i32) {
    %c0_i32 = arith.constant 0 : i32
    %c0_i32_0 = arith.constant 0 : i32
    %c0_i32_1 = arith.constant 0 : i32
    return %c0_i32, %c0_i32_0 : i32, i32
  }
  func.func @transform_3(%arg0: i32) -> (i32, i32) {
    %c0_i32 = arith.constant 0 : i32
    %c0_i32_0 = arith.constant 0 : i32
    %c0_i32_1 = arith.constant 0 : i32
    return %c0_i32, %c0_i32_0 : i32, i32
  }
  func.func @transform_4(%arg0: i32) -> (i32, i32) {
    %c0_i32 = arith.constant 0 : i32
    %c0_i32_0 = arith.constant 0 : i32
    return %arg0, %c0_i32 : i32, i32
  }
}

</mosaic_0001>

<llo_original>
// kernel: tpu_custom_call.1
$region0: #{tpu_custom_call.1}
  #allocation0 [shape = 'u32[]', space=smem, size = 0x4, offset = 0x4, fixed_abs, tag = 'smem constant byte address 0x4 - core index']
  #allocation1 [shape = 'u32[144,128]{1,0:T(1,128)}', space=vmem, size = 0x12000, scoped, tag = 'internal scratch']
  %s0 = inlined_call_operand.hbm [shape: f32[16,8,32], index: 0, kind: input, shape index: {}]
  %s1 = inlined_call_operand.hbm [shape: f32[32,64], index: 1, kind: input, shape index: {}]
  %s2 = inlined_call_operand.vmem [shape: f32[1,64], index: 2, kind: input, shape index: {}]
  %s3 = inlined_call_operand.vmem [shape: f32[1,64], index: 3, kind: input, shape index: {}]
  %s4 = inlined_call_operand.hbm [shape: f32[16,32], index: 4, kind: output, shape index: {}]
  %s5 = sld [smem:[#allocation0]]
  $region57: #{tpu_custom_call.1} parent=0
    _
  %s7 = ssub.s32 1, %s5
  %s8 = scalar_select 0, %s7, %s5
  $region1: #{tpu_custom_call.1} parent=0
    #allocation2 [shape = 'u8[65536]{0}', space=vmem, size = 0x10000, scoped, tag = 'input window, operand 0']
    #allocation3 [shape = 's32[2]{0}', space=sflag, size = 0x8, scoped, tag = 'scoped memory for tpu_custom_call.1']
    #allocation4 [shape = 's32[2]{0}', space=sflag, size = 0x8, scoped, tag = 'scoped memory for tpu_custom_call.1']
    #allocation5 [shape = 'u8[16384]{0}', space=vmem, size = 0x4000, scoped, tag = 'input window, operand 1, single buffered']
    #allocation6 [shape = 's32[1]{0}', space=sflag, size = 0x4, scoped, tag = 'scoped memory for tpu_custom_call.1']
    #allocation7 [shape = 'u8[8192]{0}', space=vmem, size = 0x2000, scoped, tag = 'output window, operand 0']
    %9 = vsyncpa [#allocation3], 0
    %s10 = scalar_lea.sflag [#allocation3], 1
    %11 = vsyncpa %s10, 0
    %12 = vsyncpa [#allocation6], 0
    %13 = vsyncpa [#allocation4], 0
    %s14 = scalar_lea.sflag [#allocation4], 1
    %15 = vsyncpa %s14, 0
    loop: start=0, step=1, limit=4
    $region2: #{tpu_custom_call.1} parent=1 // loop_pre_header
      _
    $region3: #{tpu_custom_call.1} parent=1 // loop_header
      %s17 = sphi 0, %s21
      %p18 = scmp.ge.s32.totalorder %s17, 4
      %s27 = sphi 0, %s29
      %s30 = sphi 0, %s27
      %s31 = sphi 0, %s30
      %s47 = sphi 0, %s31
      %s51 = sphi 0, %s51
      %s53 = sphi 0, %s51
      %s54 = sphi 0, %s53
      %s68 = sphi 0, %s54
      %s72 = sphi 0, %s72
      %s74 = sphi 0, %s72
      %s75 = sphi 0, %s74
      %s89 = sphi 0, %s75
      %s93 = sphi 0, %s93
      %s95 = sphi 0, %s93
      %s96 = sphi 0, %s95
      %s110 = sphi 0, %s96
      %s116 = sphi 0, %s118
      %s119 = sphi 0, %s116
      %s120 = sphi 0, %s119
      %s136 = sphi 0, %s120
    $region4: #{tpu_custom_call.1} parent=1 // loop_header_branch
      %20 = sbr.rel (%p18) target = $region8
    $region5: #{tpu_custom_call.1} parent=1 // loop_body
      %s22 = ssub.s32 %s17, 1
      %s23 = ssub.s32 %s17, 2
      %s24 = sadd.s32 %s17, 1
      %s25 = ssub.s32 %s17, %s24
      %p26 = scmp.eq.s32.totalorder %s25, 0
      %s28 = sadd.s32 %s27, 1
      %s29 = scalar_select %p26, %s27, %s28
      %p32 = pneg %p26
      %p33 = scmp.eq.s32.totalorder %s17, 1
      %p34 = por %p32, %p33
      %p35 = scmp.ne.s32.totalorder %s27, %s30
      %p36 = scmp.eq.s32.totalorder %s17, 0
      %p37 = por %p35, %p36
      %p38 = scmp.ne.s32.totalorder %s27, %s30
      %p39 = scmp.eq.s32.totalorder %s22, 1
      %p40 = por %p38, %p39
      %p41 = scmp.ne.s32.totalorder %s30, %s31
      %p42 = scmp.eq.s32.totalorder %s22, 0
      %p43 = por %p41, %p42
      %p44 = scmp.ne.s32.totalorder %s30, %s31
      %p45 = scmp.eq.s32.totalorder %s23, 1
      %p46 = por %p44, %p45
      %p48 = scmp.ne.s32.totalorder %s31, %s47
      %p49 = scmp.eq.s32.totalorder %s23, 0
      %p50 = por %p48, %p49
      %s52 = sadd.s32 %s51, 1
      %p55 = scmp.eq.s32.totalorder %s17, 1
      %p56 = scmp.ne.s32.totalorder %s51, %s53
      %p57 = scmp.eq.s32.totalorder %s17, 0
      %p58 = por %p56, %p57
      %p59 = scmp.ne.s32.totalorder %s51, %s53
      %p60 = scmp.eq.s32.totalorder %s22, 1
      %p61 = por %p59, %p60
      %p62 = scmp.ne.s32.totalorder %s53, %s54
      %p63 = scmp.eq.s32.totalorder %s22, 0
      %p64 = por %p62, %p63
      %p65 = scmp.ne.s32.totalorder %s53, %s54
      %p66 = scmp.eq.s32.totalorder %s23, 1
      %p67 = por %p65, %p66
      %p69 = scmp.ne.s32.totalorder %s54, %s68
      %p70 = scmp.eq.s32.totalorder %s23, 0
      %p71 = por %p69, %p70
      %s73 = sadd.s32 %s72, 1
      %p76 = scmp.eq.s32.totalorder %s17, 1
      %p77 = scmp.ne.s32.totalorder %s72, %s74
      %p78 = scmp.eq.s32.totalorder %s17, 0
      %p79 = por %p77, %p78
      %p80 = scmp.ne.s32.totalorder %s72, %s74
      %p81 = scmp.eq.s32.totalorder %s22, 1
      %p82 = por %p80, %p81
      %p83 = scmp.ne.s32.totalorder %s74, %s75
      %p84 = scmp.eq.s32.totalorder %s22, 0
      %p85 = por %p83, %p84
      %p86 = scmp.ne.s32.totalorder %s74, %s75
      %p87 = scmp.eq.s32.totalorder %s23, 1
      %p88 = por %p86, %p87
      %p90 = scmp.ne.s32.totalorder %s75, %s89
      %p91 = scmp.eq.s32.totalorder %s23, 0
      %p92 = por %p90, %p91
      %s94 = sadd.s32 %s93, 1
      %p97 = scmp.eq.s32.totalorder %s17, 1
      %p98 = scmp.ne.s32.totalorder %s93, %s95
      %p99 = scmp.eq.s32.totalorder %s17, 0
      %p100 = por %p98, %p99
      %p101 = scmp.ne.s32.totalorder %s93, %s95
      %p102 = scmp.eq.s32.totalorder %s22, 1
      %p103 = por %p101, %p102
      %p104 = scmp.ne.s32.totalorder %s95, %s96
      %p105 = scmp.eq.s32.totalorder %s22, 0
      %p106 = por %p104, %p105
      %p107 = scmp.ne.s32.totalorder %s95, %s96
      %p108 = scmp.eq.s32.totalorder %s23, 1
      %p109 = por %p107, %p108
      %p111 = scmp.ne.s32.totalorder %s96, %s110
      %p112 = scmp.eq.s32.totalorder %s23, 0
      %p113 = por %p111, %p112
      %s114 = ssub.s32 %s17, %s24
      %p115 = scmp.eq.s32.totalorder %s114, 0
      %s117 = sadd.s32 %s116, 1
      %s118 = scalar_select %p115, %s116, %s117
      %p121 = pneg %p115
      %p122 = scmp.eq.s32.totalorder %s17, 1
      %p123 = por %p121, %p122
      %p124 = scmp.ne.s32.totalorder %s116, %s119
      %p125 = scmp.eq.s32.totalorder %s17, 0
      %p126 = por %p124, %p125
      %p127 = scmp.ne.s32.totalorder %s116, %s119
      %p128 = scmp.eq.s32.totalorder %s22, 1
      %p129 = por %p127, %p128
      %p130 = scmp.ne.s32.totalorder %s119, %s120
      %p131 = scmp.eq.s32.totalorder %s22, 0
      %p132 = por %p130, %p131
      %p133 = scmp.ne.s32.totalorder %s119, %s120
      %p134 = scmp.eq.s32.totalorder %s23, 1
      %p135 = por %p133, %p134
      %p137 = scmp.ne.s32.totalorder %s120, %s136
      %p138 = scmp.eq.s32.totalorder %s23, 0
      %p139 = por %p137, %p138
      %p140 = scmp.le.s32.totalorder 1, %s17
      %p141 = scmp.lt.s32.totalorder %s17, 3
      %p142 = pnand %p140, %p141
      %p143 = pneg %p142
      // Predicated region
      $region9: #{tpu_custom_call.1} parent=5 // pred_check
        _
      $region10: #{tpu_custom_call.1} parent=5 // pred_check_branch
        %145 = sbr.rel (%p142) target = $region12
      $region11: #{tpu_custom_call.1} parent=5 // pred_region
        %s146 = ssub.s32 %s17, 1
        // Predicated region
        $region13: #{tpu_custom_call.1} parent=11 // pred_check
          %p147 = pneg %p64
        $region14: #{tpu_custom_call.1} parent=11 // pred_check_branch
          %149 = sbr.rel (%p147) target = $region16
        $region15: #{tpu_custom_call.1} parent=11 // pred_region
          %s151 = ssub.s32 512, 512
          %152 = vsyncadd [#allocation6], %s151
          %s153 = sshll.u32 [#allocation5], 4
          %s154 = int_to_ptr.vmem [resolvable:$true] %s153
          %159 = dma.hbm_to_vmem [thread:$0]  %s1, 512, %s154, [#allocation6], 128, 128, 8
        $region16: #{tpu_custom_call.1} parent=11 // pred_fallthru
          _
        // Predicated region
        $region17: #{tpu_custom_call.1} parent=11 // pred_check
          %p160 = pneg %p85
        $region18: #{tpu_custom_call.1} parent=11 // pred_check_branch
          %162 = sbr.rel (%p160) target = $region20
        $region19: #{tpu_custom_call.1} parent=11 // pred_region
          _
        $region20: #{tpu_custom_call.1} parent=11 // pred_fallthru
          _
        // Predicated region
        $region21: #{tpu_custom_call.1} parent=11 // pred_check
          %p163 = pneg %p106
        $region22: #{tpu_custom_call.1} parent=11 // pred_check_branch
          %165 = sbr.rel (%p163) target = $region24
        $region23: #{tpu_custom_call.1} parent=11 // pred_region
          _
        $region24: #{tpu_custom_call.1} parent=11 // pred_fallthru
          _
      $region12: #{tpu_custom_call.1} parent=5 // pred_fallthru
        _
      %p166 = scmp.lt.s32.totalorder %s17, 2
      // Predicated region
      $region25: #{tpu_custom_call.1} parent=5 // pred_check
        %p167 = pneg %p166
      $region26: #{tpu_custom_call.1} parent=5 // pred_check_branch
        %169 = sbr.rel (%p167) target = $region28
      $region27: #{tpu_custom_call.1} parent=5 // pred_region
        // Predicated region
        $region29: #{tpu_custom_call.1} parent=27 // pred_check
          %p170 = pneg %p37
        $region30: #{tpu_custom_call.1} parent=27 // pred_check_branch
          %172 = sbr.rel (%p170) target = $region32
        $region31: #{tpu_custom_call.1} parent=27 // pred_region
          %s173 = sand.u32 %s27, 1
          %s174 = scalar_lea.sflag [#allocation3], %s173
          %s175 = sand.u32 %s27, 1
          %s176 = smul.addr %s175, 64
          %s177 = scalar_lea.vmem [#allocation2], %s176
          %s178 = smul.u32 8, %s17
          %s180 = ssub.s32 1024, 1024
          %181 = vsyncadd %s174, %s180
          %s182 = smul.addr %s178, 128
          %s183 = scalar_lea.hbm %s0, %s182
          %s184 = sshll.u32 %s177, 4
          %s185 = int_to_ptr.vmem [resolvable:$true] %s184
          %190 = dma.hbm_to_vmem [thread:$0]  %s183, 1024, %s185, %s174, 128, 128, 8
        $region32: #{tpu_custom_call.1} parent=27 // pred_fallthru
          _
      $region28: #{tpu_custom_call.1} parent=5 // pred_fallthru
        _
      %p191 = scmp.le.s32.totalorder 1, %s17
      %p192 = scmp.lt.s32.totalorder %s17, 3
      %p193 = pnand %p191, %p192
      %p194 = pneg %p193
      // Predicated region
      $region33: #{tpu_custom_call.1} parent=5 // pred_check
        _
      $region34: #{tpu_custom_call.1} parent=5 // pred_check_branch
        %196 = sbr.rel (%p193) target = $region36
      $region35: #{tpu_custom_call.1} parent=5 // pred_region
        %s197 = ssub.s32 %s17, 1
        %s198 = sand.u32 %s30, 1
        %s199 = scalar_lea.sflag [#allocation3], %s198
        %s200 = sand.u32 %s30, 1
        %s201 = smul.addr %s200, 64
        %s202 = scalar_lea.vmem [#allocation2], %s201
        // Predicated region
        $region37: #{tpu_custom_call.1} parent=35 // pred_check
          %p203 = pneg %p43
        $region38: #{tpu_custom_call.1} parent=35 // pred_check_branch
          %205 = sbr.rel (%p203) target = $region40
        $region39: #{tpu_custom_call.1} parent=35 // pred_region
          %206 = dma.done %s199, 1024
        $region40: #{tpu_custom_call.1} parent=35 // pred_fallthru
          _
        // Predicated region
        $region41: #{tpu_custom_call.1} parent=35 // pred_check
          %p207 = pneg %p64
        $region42: #{tpu_custom_call.1} parent=35 // pred_check_branch
          %209 = sbr.rel (%p207) target = $region44
        $region43: #{tpu_custom_call.1} parent=35 // pred_region
          %210 = dma.done [#allocation6], 512
        $region44: #{tpu_custom_call.1} parent=35 // pred_fallthru
          _
        %s211 = sand.u32 %s30, 1
        %s212 = scalar_lea.sflag [#allocation3], %s211
        %s213 = sand.u32 %s30, 1
        %s214 = smul.addr %s213, 64
        %s215 = scalar_lea.vmem [#allocation2], %s214
        %p216 = pneg %p43
        %p217 = pneg %p40
        %p218 = pneg %p64
        %p219 = pneg %p61
        %p220 = pneg %p85
        %p221 = pneg %p82
        %p222 = pneg %p106
        %p223 = pneg %p103
        %p224 = pneg %p132
        %p225 = pneg %p129
        %s226 = sand.u32 %s119, 1
        %s227 = scalar_lea.sflag [#allocation4], %s226
        %s228 = sand.u32 %s119, 1
        %s229 = smul.addr %s228, 8
        %s230 = scalar_lea.vmem [#allocation7], %s229
        %s231 = smul.u32 8, %s22
        %v232 = vld [vmem:[%s202] sm:$0xff]
        %v233 = vld [vmem:[%s202 + $0x8] sm:$0xff]
        %v234 = vld [vmem:[%s202 + $0x10] sm:$0xff]
        %v235 = vld [vmem:[%s202 + $0x18] sm:$0xff]
        %v236 = vld [vmem:[%s202 + $0x20] sm:$0xff]
        %v237 = vld [vmem:[%s202 + $0x28] sm:$0xff]
        %v238 = vld [vmem:[%s202 + $0x30] sm:$0xff]
        %v239 = vld [vmem:[%s202 + $0x38] sm:$0xff]
        %v240 = vld [vmem:[#allocation5] sm:$0xff]
        %v241 = vld [vmem:[#allocation5 + $0x8] sm:$0xff]
        %v242 = vld [vmem:[#allocation5 + $0x10] sm:$0xff]
        %v243 = vld [vmem:[#allocation5 + $0x18] sm:$0xff]
        %v244 = vld [vmem:[%s2] sm:$0x1]
        %v246 = vlaneseq
        %v247 = vshrl.u32 %v246, 7
        %v248 = vsub.s32 0, %v247
        %v249 = vrot.slane %v244, %v248
        %vm251 = vcmask 261120
        %v253 = vsel %vm251, %v232, 0
        %v256 = vsel %vm251, %v233, 0
        %v259 = vsel %vm251, %v234, 0
        %v262 = vsel %vm251, %v235, 0
        %v265 = vsel %vm251, %v236, 0
        %v268 = vsel %vm251, %v237, 0
        %v271 = vsel %vm251, %v238, 0
        %v274 = vsel %vm251, %v239, 0
        %276 = vmatprep.subr.mxu0 0.0
        %277 = vmatpush1.msra.mxu0 0.0
        %278 = vmatprep.subr.mxu0 0.0
        %279 = vmatpush1.msra.mxu0 0.0
        %280 = vmatprep.subr.mxu0 0.0
        %281 = vmatpush1.msra.mxu0 0.0
        %282 = vmatprep.subr.mxu0 0.0
        %283 = vmatpush1.msra.mxu0 0.0
        %284 = vmatprep.subr.mxu0 0.0
        %285 = vmatpush1.msra.mxu0 0.0
        %286 = vmatprep.subr.mxu0 0.0
        %287 = vmatpush1.msra.mxu0 0.0
        %288 = vmatprep.subr.mxu0 0.0
        %289 = vmatpush1.msra.mxu0 0.0
        %290 = vmatprep.subr.mxu0 0.0
        %291 = vmatpush1.msra.mxu0 0.0
        %292 = vmatprep.subr.mxu0 0.0
        %293 = vmatpush1.msra.mxu0 0.0
        %294 = vmatprep.subr.mxu0 0.0
        %295 = vmatpush1.msra.mxu0 0.0
        %296 = vmatprep.subr.mxu0 0.0
        %297 = vmatpush1.msra.mxu0 0.0
        %298 = vmatprep.subr.mxu0 0.0
        %299 = vmatpush1.msra.mxu0 0.0
        %300 = vmatprep.subr.mxu0 0.0
        %301 = vmatpush1.msra.mxu0 %v243
        %302 = vmatprep.subr.mxu0 0.0
        %303 = vmatpush1.msra.mxu0 %v242
        %304 = vmatprep.subr.mxu0 0.0
        %305 = vmatpush1.msra.mxu0 %v241
        %306 = vmatprep.subr.mxu0 0.0
        %307 = vmatpush1.msra.mxu0 %v240
        %308 = vmatprep.subr.mxu0 0.0
        %309 = vmatpush2.msra.mxu0 0.0
        %310 = vmatprep.subr.mxu0 0.0
        %311 = vmatpush2.msra.mxu0 0.0
        %312 = vmatprep.subr.mxu0 0.0
        %313 = vmatpush2.msra.mxu0 0.0
        %314 = vmatprep.subr.mxu0 0.0
        %315 = vmatpush2.msra.mxu0 0.0
        %316 = vmatprep.subr.mxu0 0.0
        %317 = vmatpush2.msra.mxu0 0.0
        %318 = vmatprep.subr.mxu0 0.0
        %319 = vmatpush2.msra.mxu0 0.0
        %320 = vmatprep.subr.mxu0 0.0
        %321 = vmatpush2.msra.mxu0 0.0
        %322 = vmatprep.subr.mxu0 0.0
        %323 = vmatpush2.msra.mxu0 0.0
        %324 = vmatprep.subr.mxu0 0.0
        %325 = vmatpush2.msra.mxu0 0.0
        %326 = vmatprep.subr.mxu0 0.0
        %327 = vmatpush2.msra.mxu0 0.0
        %328 = vmatprep.subr.mxu0 0.0
        %329 = vmatpush2.msra.mxu0 0.0
        %330 = vmatprep.subr.mxu0 0.0
        %331 = vmatpush2.msra.mxu0 0.0
        %332 = vmatprep.subr.mxu0 0.0
        %333 = vmatpush2.msra.mxu0 0.0
        %334 = vmatprep.subr.mxu0 0.0
        %335 = vmatpush2.msra.mxu0 0.0
        %336 = vmatprep.subr.mxu0 0.0
        %337 = vmatpush2.msra.mxu0 0.0
        %338 = vmatprep.subr.mxu0 0.0
        %339 = vmatpush2.msra.mxu0 0.0
        %340 = vmatprep.mubr.f32.mxu0 0.0
        %341 = vmatmul.mubr.f32.gmra.mxu0 %v253
        %v342 = vpop.f32.mrf.mxu0
        %v343 = vadd.f32 %v249, %v342
        %v344 = vpop.f32.mrf.mxu0
        %345 = vmatprep.mubr.f32.mxu0 0.0
        %346 = vmatmul.mubr.f32.gmra.mxu0 %v256
        %v347 = vpop.f32.mrf.mxu0
        %v348 = vadd.f32 %v249, %v347
        %v349 = vpop.f32.mrf.mxu0
        %350 = vmatprep.mubr.f32.mxu0 0.0
        %351 = vmatmul.mubr.f32.gmra.mxu0 %v259
        %v352 = vpop.f32.mrf.mxu0
        %v353 = vadd.f32 %v249, %v352
        %v354 = vpop.f32.mrf.mxu0
        %355 = vmatprep.mubr.f32.mxu0 0.0
        %356 = vmatmul.mubr.f32.gmra.mxu0 %v262
        %v357 = vpop.f32.mrf.mxu0
        %v358 = vadd.f32 %v249, %v357
        %v359 = vpop.f32.mrf.mxu0
        %360 = vmatprep.mubr.f32.mxu0 0.0
        %361 = vmatmul.mubr.f32.gmra.mxu0 %v265
        %v362 = vpop.f32.mrf.mxu0
        %v363 = vadd.f32 %v249, %v362
        %v364 = vpop.f32.mrf.mxu0
        %365 = vmatprep.mubr.f32.mxu0 0.0
        %366 = vmatmul.mubr.f32.gmra.mxu0 %v268
        %v367 = vpop.f32.mrf.mxu0
        %v368 = vadd.f32 %v249, %v367
        %v369 = vpop.f32.mrf.mxu0
        %370 = vmatprep.mubr.f32.mxu0 0.0
        %371 = vmatmul.mubr.f32.gmra.mxu0 %v271
        %v372 = vpop.f32.mrf.mxu0
        %v373 = vadd.f32 %v249, %v372
        %v374 = vpop.f32.mrf.mxu0
        %375 = vmatprep.mubr.f32.mxu0 0.0
        %376 = vmatmul.mubr.f32.gmra.mxu0 %v274
        %v377 = vpop.f32.mrf.mxu0
        %v378 = vadd.f32 %v249, %v377
        %v379 = vpop.f32.mrf.mxu0
        %380 = vdwg.mxu0
        %v381 = vmax.f32 %v343, 0.0
        %v382 = vmax.f32 %v348, 0.0
        %v383 = vmax.f32 %v353, 0.0
        %v384 = vmax.f32 %v358, 0.0
        %v385 = vmax.f32 %v363, 0.0
        %v386 = vmax.f32 %v368, 0.0
        %v387 = vmax.f32 %v373, 0.0
        %v388 = vmax.f32 %v378, 0.0
        %v389 = vld [vmem:[%s3] sm:$0x1]
        %v391 = vlaneseq
        %v392 = vshrl.u32 %v391, 7
        %v393 = vsub.s32 0, %v392
        %v394 = vrot.slane %v389, %v393
        %v396 = vmul.f32 %v381, %v394
        %v397 = vmul.f32 %v382, %v394
        %v398 = vmul.f32 %v383, %v394
        %v399 = vmul.f32 %v384, %v394
        %v400 = vmul.f32 %v385, %v394
        %v401 = vmul.f32 %v386, %v394
        %v402 = vmul.f32 %v387, %v394
        %v403 = vmul.f32 %v388, %v394
        %vm404 = vcmask 523264
        %v405 = vsel %vm404, %v396, 0.0
        %406 = vadd.xlane.f32.xlu0 %v405
        %v407 = vpop.xlane.xlu0 %406
        %v408 = vsel %vm404, %v397, 0.0
        %409 = vadd.xlane.f32.xlu0 %v408
        %v410 = vpop.xlane.xlu0 %409
        %v411 = vsel %vm404, %v398, 0.0
        %412 = vadd.xlane.f32.xlu0 %v411
        %v413 = vpop.xlane.xlu0 %412
        %v414 = vsel %vm404, %v399, 0.0
        %415 = vadd.xlane.f32.xlu0 %v414
        %v416 = vpop.xlane.xlu0 %415
        %v417 = vsel %vm404, %v400, 0.0
        %418 = vadd.xlane.f32.xlu0 %v417
        %v419 = vpop.xlane.xlu0 %418
        %v420 = vsel %vm404, %v401, 0.0
        %421 = vadd.xlane.f32.xlu0 %v420
        %v422 = vpop.xlane.xlu0 %421
        %v423 = vsel %vm404, %v402, 0.0
        %424 = vadd.xlane.f32.xlu0 %v423
        %v425 = vpop.xlane.xlu0 %424
        %v426 = vsel %vm404, %v403, 0.0
        %427 = vadd.xlane.f32.xlu0 %v426
        %v428 = vpop.xlane.xlu0 %427
        %v429 = vrot.slane %v407, 4
        %v430 = vmax.f32 %v407, %v429
        %v431 = vrot.slane %v430, 2
        %v432 = vmax.f32 %v430, %v431
        %v433 = vrot.slane %v432, 1
        %v434 = vmax.f32 %v432, %v433
        %v435 = vrot.slane %v410, 4
        %v436 = vmax.f32 %v410, %v435
        %v437 = vrot.slane %v436, 2
        %v438 = vmax.f32 %v436, %v437
        %v439 = vrot.slane %v438, 1
        %v440 = vmax.f32 %v438, %v439
        %v441 = vrot.slane %v413, 4
        %v442 = vmax.f32 %v413, %v441
        %v443 = vrot.slane %v442, 2
        %v444 = vmax.f32 %v442, %v443
        %v445 = vrot.slane %v444, 1
        %v446 = vmax.f32 %v444, %v445
        %v447 = vrot.slane %v416, 4
        %v448 = vmax.f32 %v416, %v447
        %v449 = vrot.slane %v448, 2
        %v450 = vmax.f32 %v448, %v449
        %v451 = vrot.slane %v450, 1
        %v452 = vmax.f32 %v450, %v451
        %v453 = vrot.slane %v419, 4
        %v454 = vmax.f32 %v419, %v453
        %v455 = vrot.slane %v454, 2
        %v456 = vmax.f32 %v454, %v455
        %v457 = vrot.slane %v456, 1
        %v458 = vmax.f32 %v456, %v457
        %v459 = vrot.slane %v422, 4
        %v460 = vmax.f32 %v422, %v459
        %v461 = vrot.slane %v460, 2
        %v462 = vmax.f32 %v460, %v461
        %v463 = vrot.slane %v462, 1
        %v464 = vmax.f32 %v462, %v463
        %v465 = vrot.slane %v425, 4
        %v466 = vmax.f32 %v425, %v465
        %v467 = vrot.slane %v466, 2
        %v468 = vmax.f32 %v466, %v467
        %v469 = vrot.slane %v468, 1
        %v470 = vmax.f32 %v468, %v469
        %v471 = vrot.slane %v428, 4
        %v472 = vmax.f32 %v428, %v471
        %v473 = vrot.slane %v472, 2
        %v474 = vmax.f32 %v472, %v473
        %v475 = vrot.slane %v474, 1
        %v476 = vmax.f32 %v474, %v475
        %v477 = vsub.f32 %v407, %v434
        %v478 = vsub.f32 %v410, %v440
        %v479 = vsub.f32 %v413, %v446
        %v480 = vsub.f32 %v416, %v452
        %v481 = vsub.f32 %v419, %v458
        %v482 = vsub.f32 %v422, %v464
        %v483 = vsub.f32 %v425, %v470
        %v484 = vsub.f32 %v428, %v476
        %v485 = vmul.f32 %v477, 1.442695
        %v486 = vpow.pop %v485
        %v487 = vmul.f32 %v478, 1.442695
        %v488 = vpow.pop %v487
        %v489 = vmul.f32 %v479, 1.442695
        %v490 = vpow.pop %v489
        %v491 = vmul.f32 %v480, 1.442695
        %v492 = vpow.pop %v491
        %v493 = vmul.f32 %v481, 1.442695
        %v494 = vpow.pop %v493
        %v495 = vmul.f32 %v482, 1.442695
        %v496 = vpow.pop %v495
        %v497 = vmul.f32 %v483, 1.442695
        %v498 = vpow.pop %v497
        %v499 = vmul.f32 %v484, 1.442695
        %v500 = vpow.pop %v499
        %v501 = vrot.slane %v486, 4
        %v502 = vadd.f32 %v486, %v501
        %v503 = vrot.slane %v502, 2
        %v504 = vadd.f32 %v502, %v503
        %v505 = vrot.slane %v504, 1
        %v506 = vadd.f32 %v504, %v505
        %v507 = vrot.slane %v488, 4
        %v508 = vadd.f32 %v488, %v507
        %v509 = vrot.slane %v508, 2
        %v510 = vadd.f32 %v508, %v509
        %v511 = vrot.slane %v510, 1
        %v512 = vadd.f32 %v510, %v511
        %v513 = vrot.slane %v490, 4
        %v514 = vadd.f32 %v490, %v513
        %v515 = vrot.slane %v514, 2
        %v516 = vadd.f32 %v514, %v515
        %v517 = vrot.slane %v516, 1
        %v518 = vadd.f32 %v516, %v517
        %v519 = vrot.slane %v492, 4
        %v520 = vadd.f32 %v492, %v519
        %v521 = vrot.slane %v520, 2
        %v522 = vadd.f32 %v520, %v521
        %v523 = vrot.slane %v522, 1
        %v524 = vadd.f32 %v522, %v523
        %v525 = vrot.slane %v494, 4
        %v526 = vadd.f32 %v494, %v525
        %v527 = vrot.slane %v526, 2
        %v528 = vadd.f32 %v526, %v527
        %v529 = vrot.slane %v528, 1
        %v530 = vadd.f32 %v528, %v529
        %v531 = vrot.slane %v496, 4
        %v532 = vadd.f32 %v496, %v531
        %v533 = vrot.slane %v532, 2
        %v534 = vadd.f32 %v532, %v533
        %v535 = vrot.slane %v534, 1
        %v536 = vadd.f32 %v534, %v535
        %v537 = vrot.slane %v498, 4
        %v538 = vadd.f32 %v498, %v537
        %v539 = vrot.slane %v538, 2
        %v540 = vadd.f32 %v538, %v539
        %v541 = vrot.slane %v540, 1
        %v542 = vadd.f32 %v540, %v541
        %v543 = vrot.slane %v500, 4
        %v544 = vadd.f32 %v500, %v543
        %v545 = vrot.slane %v544, 2
        %v546 = vadd.f32 %v544, %v545
        %v547 = vrot.slane %v546, 1
        %v548 = vadd.f32 %v546, %v547
        %v549 = vrcp.pop %v506
        %v550 = vmul.f32 %v486, %v549
        %v551 = vrcp.pop %v512
        %v552 = vmul.f32 %v488, %v551
        %v553 = vrcp.pop %v518
        %v554 = vmul.f32 %v490, %v553
        %v555 = vrcp.pop %v524
        %v556 = vmul.f32 %v492, %v555
        %v557 = vrcp.pop %v530
        %v558 = vmul.f32 %v494, %v557
        %v559 = vrcp.pop %v536
        %v560 = vmul.f32 %v496, %v559
        %v561 = vrcp.pop %v542
        %v562 = vmul.f32 %v498, %v561
        %v563 = vrcp.pop %v548
        %v564 = vmul.f32 %v500, %v563
        %v565 = vmul.f32 %v232, %v550
        %v566 = vmul.f32 %v233, %v552
        %v567 = vmul.f32 %v234, %v554
        %v568 = vmul.f32 %v235, %v556
        %v569 = vmul.f32 %v236, %v558
        %v570 = vmul.f32 %v237, %v560
        %v571 = vmul.f32 %v238, %v562
        %v572 = vmul.f32 %v239, %v564
        %v573 = vsel %vm251, %v565, 0.0
        %v574 = vrot.slane %v573, 4
        %v575 = vadd.f32 %v573, %v574
        %v576 = vrot.slane %v575, 2
        %v577 = vadd.f32 %v575, %v576
        %v578 = vrot.slane %v577, 1
        %v579 = vadd.f32 %v577, %v578
        %v580 = vsel %vm251, %v566, 0.0
        %v581 = vrot.slane %v580, 4
        %v582 = vadd.f32 %v580, %v581
        %v583 = vrot.slane %v582, 2
        %v584 = vadd.f32 %v582, %v583
        %v585 = vrot.slane %v584, 1
        %v586 = vadd.f32 %v584, %v585
        %v587 = vsel %vm251, %v567, 0.0
        %v588 = vrot.slane %v587, 4
        %v589 = vadd.f32 %v587, %v588
        %v590 = vrot.slane %v589, 2
        %v591 = vadd.f32 %v589, %v590
        %v592 = vrot.slane %v591, 1
        %v593 = vadd.f32 %v591, %v592
        %v594 = vsel %vm251, %v568, 0.0
        %v595 = vrot.slane %v594, 4
        %v596 = vadd.f32 %v594, %v595
        %v597 = vrot.slane %v596, 2
        %v598 = vadd.f32 %v596, %v597
        %v599 = vrot.slane %v598, 1
        %v600 = vadd.f32 %v598, %v599
        %v601 = vsel %vm251, %v569, 0.0
        %v602 = vrot.slane %v601, 4
        %v603 = vadd.f32 %v601, %v602
        %v604 = vrot.slane %v603, 2
        %v605 = vadd.f32 %v603, %v604
        %v606 = vrot.slane %v605, 1
        %v607 = vadd.f32 %v605, %v606
        %v608 = vsel %vm251, %v570, 0.0
        %v609 = vrot.slane %v608, 4
        %v610 = vadd.f32 %v608, %v609
        %v611 = vrot.slane %v610, 2
        %v612 = vadd.f32 %v610, %v611
        %v613 = vrot.slane %v612, 1
        %v614 = vadd.f32 %v612, %v613
        %v615 = vsel %vm251, %v571, 0.0
        %v616 = vrot.slane %v615, 4
        %v617 = vadd.f32 %v615, %v616
        %v618 = vrot.slane %v617, 2
        %v619 = vadd.f32 %v617, %v618
        %v620 = vrot.slane %v619, 1
        %v621 = vadd.f32 %v619, %v620
        %v622 = vsel %vm251, %v572, 0.0
        %v623 = vrot.slane %v622, 4
        %v624 = vadd.f32 %v622, %v623
        %v625 = vrot.slane %v624, 2
        %v626 = vadd.f32 %v624, %v625
        %v627 = vrot.slane %v626, 1
        %v628 = vadd.f32 %v626, %v627
        %vm637 = vcmask 1041409
        %v638 = vsel %vm637, %v586, %v579
        %vm639 = vcmask 1042434
        %v640 = vsel %vm639, %v593, %v638
        %vm641 = vcmask 1043459
        %v642 = vsel %vm641, %v600, %v640
        %vm643 = vcmask 1044484
        %v644 = vsel %vm643, %v607, %v642
        %vm645 = vcmask 1045509
        %v646 = vsel %vm645, %v614, %v644
        %vm647 = vcmask 1046534
        %v648 = vsel %vm647, %v621, %v646
        %vm649 = vcmask 1047559
        %v650 = vsel %vm649, %v628, %v648
        %652 = vst.msk [vmem:[%s230] sm:$0xff] %vm251, %v650
        %s653 = sand.u32 %s119, 1
        %s654 = scalar_lea.sflag [#allocation4], %s653
        %s655 = sand.u32 %s119, 1
        %s656 = smul.addr %s655, 8
        %s657 = scalar_lea.vmem [#allocation7], %s656
        // Predicated region
        $region45: #{tpu_custom_call.1} parent=35 // pred_check
          %p658 = pneg %p129
        $region46: #{tpu_custom_call.1} parent=35 // pred_check_branch
          %660 = sbr.rel (%p658) target = $region48
        $region47: #{tpu_custom_call.1} parent=35 // pred_region
          %s662 = ssub.s32 128, 128
          %663 = vsyncadd %s654, %s662
          %s664 = smul.addr %s22, 128
          %s665 = scalar_lea.hbm %s4, %s664
          %s667 = sshll.u32 %s657, 4
          %s668 = int_to_ptr.vmem [resolvable:$true] %s667
          %670 = dma.vmem_to_hbm [thread:$0]  %s668, 128, %s665, %s654
        $region48: #{tpu_custom_call.1} parent=35 // pred_fallthru
          _
      $region36: #{tpu_custom_call.1} parent=5 // pred_fallthru
        _
      %p671 = scmp.le.s32.totalorder 2, %s17
      // Predicated region
      $region49: #{tpu_custom_call.1} parent=5 // pred_check
        %p672 = pneg %p671
      $region50: #{tpu_custom_call.1} parent=5 // pred_check_branch
        %674 = sbr.rel (%p672) target = $region52
      $region51: #{tpu_custom_call.1} parent=5 // pred_region
        %s675 = ssub.s32 %s17, 2
        // Predicated region
        $region53: #{tpu_custom_call.1} parent=51 // pred_check
          %p676 = pneg %p135
        $region54: #{tpu_custom_call.1} parent=51 // pred_check_branch
          %678 = sbr.rel (%p676) target = $region56
        $region55: #{tpu_custom_call.1} parent=51 // pred_region
          %s679 = sand.u32 %s120, 1
          %s680 = scalar_lea.sflag [#allocation4], %s679
          %s681 = sand.u32 %s120, 1
          %s682 = smul.addr %s681, 8
          %s683 = scalar_lea.vmem [#allocation7], %s682
          %684 = dma.done %s680, 128
        $region56: #{tpu_custom_call.1} parent=51 // pred_fallthru
          _
      $region52: #{tpu_custom_call.1} parent=5 // pred_fallthru
        _
    $region6: #{tpu_custom_call.1} parent=1 // loop_footer
      %s21 = sadd.s32 1, %s17
    $region7: #{tpu_custom_call.1} parent=1 // loop_footer_branch
      %16 = sbr.rel target = $region3
    $region8: #{tpu_custom_call.1} parent=1 // loop_exit
      _
    %685 = vsyncpa [#allocation3], 1
    %s686 = scalar_lea.sflag [#allocation3], 1
    %687 = vsyncpa %s686, 1
    %688 = vsyncpa [#allocation6], 1
    %689 = vsyncpa [#allocation4], 1
    %s690 = scalar_lea.sflag [#allocation4], 1
    %691 = vsyncpa %s690, 1

</llo_original>
